<compile_context>
chip_gen: v7x
topology: tpu7x:2x2x1
jax: 0.10.0
libtpu: 0.0.40
codegen_flags: <defaults>
</compile_context>

<pallas_src>
import jax
import jax.numpy as jnp
from jax.experimental import pallas as pl
from jax.experimental.pallas import tpu as pltpu


def fc_dnet_kernel(x_ref, w_ref, b_ref, o_ref):
    # One folded linear (+ bias) + sigmoid on a lane-packed tile.
    y = jnp.dot(x_ref[...], w_ref[...], preferred_element_type=jnp.float32)
    y = y + b_ref[...]
    o_ref[...] = jax.nn.sigmoid(y).astype(o_ref.dtype)   # EUP transcendental path


def _vmem_capacity_bytes():
    try:
        return int(pltpu.get_tpu_info().vmem_capacity_bytes)
    except Exception:
        return 64 << 20        # conservative fallback (v7x per-TC physical)


def _pick_block_rows(n_rows, row_bytes, vmem_limit_bytes):
    """Largest sublane-aligned batch tile that keeps double-buffered x+out
    under ~half the scoped-VMEM limit, while leaving >=2 grid blocks."""
    budget = vmem_limit_bytes // 2
    tm = max(8, budget // (4 * row_bytes))     # x + out, 2 buffers each
    tm = min(tm, 16384)
    half = -(-n_rows // 2)                     # ceil(n_rows / 2)
    half = -(-half // 8) * 8                   # round up to sublane multiple
    return min(tm, max(8, half))


def fc_dnet_forward(x, w1, b1, w2, b2, *, block_rows=None):
    """Fused fc_dnet forward: sigmoid((x @ W1.T + b1) @ W2.T + b2).

    x : (..., in_planes)  -- arbitrary leading dims are folded into the batch.
    w1: (cluster, in_planes), b1: (cluster,)        (PyTorch Linear layout)
    w2: (in_planes, cluster), b2: (in_planes,)
    """
    orig_shape = x.shape
    in_planes = orig_shape[-1]
    dtype = x.dtype

    # ---- fold the two bias-only Linears into one effective affine map ------
    # (constant-foldable for fixed weights; amortized over the whole batch)
    w_eff = jnp.dot(w2.astype(jnp.float32), w1.astype(jnp.float32))      # (in, in)
    w_xw = w_eff.T                                                       # x @ W orientation
    b_eff = jnp.dot(w2.astype(jnp.float32), b1.astype(jnp.float32)) \
        + b2.astype(jnp.float32)                                         # (in,)

    # ---- lane-pack narrow feature dims: `pack` rows per 128-lane slab ------
    if in_planes < 128 and 128 % in_planes == 0:
        pack = 128 // in_planes
    else:
        pack = 1
    width = pack * in_planes

    if pack > 1:
        w_kernel = jnp.kron(jnp.eye(pack, dtype=jnp.float32), w_xw)      # block-diag (width, width)
        b_kernel = jnp.tile(b_eff, pack).reshape(1, width)
    else:
        w_kernel = w_xw
        b_kernel = b_eff.reshape(1, width)
    w_kernel = w_kernel.astype(dtype)
    b_kernel = b_kernel.astype(dtype)

    # ---- fold leading dims into the batch, pad to the packing factor -------
    x2d = x.reshape(-1, in_planes)
    B = x2d.shape[0]
    B_pad = -(-B // pack) * pack
    if B_pad != B:
        x2d = jnp.pad(x2d, ((0, B_pad - B), (0, 0)))
    n_rows = B_pad // pack
    x_packed = x2d.reshape(n_rows, width)        # metadata-only for contiguous f32

    # ---- generation-aware tile sizing ---------------------------------------
    vmem_cap = _vmem_capacity_bytes()
    vmem_limit = max(min(vmem_cap // 2, 64 << 20), 16 << 20)
    row_bytes = width * jnp.dtype(dtype).itemsize

    if block_rows is not None:
        tm = int(block_rows)
    else:
        tm = _pick_block_rows(n_rows, row_bytes, vmem_limit)
    tm = max(1, min(tm, n_rows))
    if tm >= n_rows or n_rows <= 8:
        tm = n_rows                              # single full block (any size OK)
    else:
        tm = max(8, (tm // 8) * 8)               # sublane-aligned tiled block
    grid_m = pl.cdiv(n_rows, tm)

    flops = 2 * n_rows * width * width
    bytes_accessed = (2 * n_rows * row_bytes
                      + w_kernel.size * w_kernel.dtype.itemsize
                      + b_kernel.size * b_kernel.dtype.itemsize)

    out_packed = pl.pallas_call(
        fc_dnet_kernel,
        out_shape=jax.ShapeDtypeStruct((n_rows, width), dtype),
        grid=(grid_m,),
        in_specs=[
            # x tiled along the batch -> double-buffered DMA overlaps compute.
            pl.BlockSpec((tm, width), lambda i: (i, 0)),
            # weight / bias: constant index_map => fetched once, VMEM-resident.
            pl.BlockSpec((width, width), lambda i: (0, 0)),
            pl.BlockSpec((1, width), lambda i: (0, 0)),
        ],
        out_specs=pl.BlockSpec((tm, width), lambda i: (i, 0)),
        compiler_params=pltpu.CompilerParams(
            dimension_semantics=("parallel",),
            vmem_limit_bytes=vmem_limit),
        cost_estimate=pl.CostEstimate(
            flops=flops,
            transcendentals=n_rows * width,
            bytes_accessed=bytes_accessed),
    )(x_packed, w_kernel, b_kernel)

    out2d = out_packed.reshape(B_pad, in_planes)[:B]
    return out2d.reshape(orig_shape)


if __name__ == "__main__":
    # SE-block style usage: N=2, H=W=16 folded into the batch, in_planes=32.
    N, H, W = 2, 16, 16
    in_planes, cluster = 32, 16

    key = jax.random.PRNGKey(0)
    kx, k1, k2, k3, k4 = jax.random.split(key, 5)

    x = jax.random.normal(kx, (N, H, W, in_planes), dtype=jnp.float32)

    # Deterministic PyTorch-Linear-style uniform init.
    bound1 = 1.0 / (in_planes ** 0.5)
    w1 = jax.random.uniform(k1, (cluster, in_planes), jnp.float32, -bound1, bound1)
    b1 = jax.random.uniform(k2, (cluster,), jnp.float32, -bound1, bound1)

    bound2 = 1.0 / (cluster ** 0.5)
    w2 = jax.random.uniform(k3, (in_planes, cluster), jnp.float32, -bound2, bound2)
    b2 = jax.random.uniform(k4, (in_planes,), jnp.float32, -bound2, bound2)

    out = fc_dnet_forward(x, w1, b1, w2, b2)
    out = jax.block_until_ready(out)

    # Pure-JAX reference (un-folded two-Linear formulation). Folded weights
    # differ only at ulp level -> slightly loosened tolerance.
    x2d = x.reshape(-1, in_planes)
    ref = jax.nn.sigmoid((x2d @ w1.T + b1) @ w2.T + b2).reshape(x.shape)
    assert out.shape == x.shape
    assert jnp.allclose(out, ref, atol=2e-5, rtol=1e-4)

    print("KERNEL_OK")
</pallas_src>

<mosaic_0001>
module attributes {stable_mosaic.version = 11 : i64} {
  func.func @fc_dnet_kernel(%arg0: i32, %arg1: memref<64x128xf32, #tpu.memory_space<vmem>>, %arg2: memref<128x128xf32, #tpu.memory_space<vmem>>, %arg3: memref<1x128xf32, #tpu.memory_space<vmem>>, %arg4: memref<64x128xf32, #tpu.memory_space<vmem>>) attributes {dimension_semantics = [#tpu.dimension_semantics<parallel>], iteration_bounds = array<i64: 2>, scalar_prefetch = 0 : i64, scratch_operands = 0 : i64, tpu.core_type = #tpu.core_type<tc>, window_params = [{transform_indices = @transform_0, window_bounds = array<i64: 64, 128>}, {pipeline_mode = #tpu.pipeline_mode<synchronous>, transform_indices = @transform_1, window_bounds = array<i64: 128, 128>}, {pipeline_mode = #tpu.pipeline_mode<synchronous>, transform_indices = @transform_2, window_bounds = array<i64: 1, 128>}, {transform_indices = @transform_3, window_bounds = array<i64: 64, 128>}]} {
    %c0 = arith.constant 0 : index
    %c0_0 = arith.constant 0 : index
    %0 = vector.load %arg1[%c0, %c0_0] : memref<64x128xf32, #tpu.memory_space<vmem>>, vector<64x128xf32>
    %c0_1 = arith.constant 0 : index
    %c0_2 = arith.constant 0 : index
    %1 = vector.load %arg2[%c0_1, %c0_2] : memref<128x128xf32, #tpu.memory_space<vmem>>, vector<128x128xf32>
    %cst = arith.constant dense<0.000000e+00> : vector<64x128xf32>
    %2 = tpu.matmul %0, %1, %cst {dimension_numbers = #tpu.dot_dimension_numbers<[1], [0], [0], [1], [0, 0, 1, 1], [], []>} : vector<64x128xf32>, vector<128x128xf32>, vector<64x128xf32> -> vector<64x128xf32>
    %c0_3 = arith.constant 0 : index
    %c0_4 = arith.constant 0 : index
    %3 = vector.load %arg3[%c0_3, %c0_4] : memref<1x128xf32, #tpu.memory_space<vmem>>, vector<1x128xf32>
    %4 = vector.broadcast %3 : vector<1x128xf32> to vector<64x128xf32>
    %5 = arith.addf %2, %4 : vector<64x128xf32>
    %6 = arith.negf %5 : vector<64x128xf32>
    %7 = math.exp %6 : vector<64x128xf32>
    %cst_5 = arith.constant 1.000000e+00 : f32
    %8 = vector.broadcast %cst_5 : f32 to vector<64x128xf32>
    %9 = arith.addf %8, %7 : vector<64x128xf32>
    %10 = arith.divf %8, %9 : vector<64x128xf32>
    %c0_6 = arith.constant 0 : index
    %c0_7 = arith.constant 0 : index
    %11 = vector.load %arg4[%c0_6, %c0_7] : memref<64x128xf32, #tpu.memory_space<vmem>>, vector<64x128xf32>
    tpu.vector_store %arg4[%c0_6, %c0_7], %10 {strides = array<i32>} : memref<64x128xf32, #tpu.memory_space<vmem>>, vector<64x128xf32>,
    return
  }
  func.func @transform_0(%arg0: i32) -> (i32, i32) {
    %c0_i32 = arith.constant 0 : i32
    %c0_i32_0 = arith.constant 0 : i32
    return %arg0, %c0_i32 : i32, i32
  }
  func.func @transform_1(%arg0: i32) -> (i32, i32) {
    %c0_i32 = arith.constant 0 : i32
    %c0_i32_0 = arith.constant 0 : i32
    %c0_i32_1 = arith.constant 0 : i32
    return %c0_i32, %c0_i32_0 : i32, i32
  }
  func.func @transform_2(%arg0: i32) -> (i32, i32) {
    %c0_i32 = arith.constant 0 : i32
    %c0_i32_0 = arith.constant 0 : i32
    %c0_i32_1 = arith.constant 0 : i32
    return %c0_i32, %c0_i32_0 : i32, i32
  }
  func.func @transform_3(%arg0: i32) -> (i32, i32) {
    %c0_i32 = arith.constant 0 : i32
    %c0_i32_0 = arith.constant 0 : i32
    return %arg0, %c0_i32 : i32, i32
  }
}

</mosaic_0001>

<llo_original>
// kernel: tpu_custom_call.1
$region0: #{tpu_custom_call.1}
  #allocation0 [shape = 'u32[]', space=smem, size = 0x4, offset = 0x4, fixed_abs, tag = 'smem constant byte address 0x4 - core index']
  #allocation1 [shape = 'u32[144,128]{1,0:T(1,128)}', space=vmem, size = 0x12000, scoped, tag = 'internal scratch']
  %s0 = inlined_call_operand.hbm [shape: f32[128,128], index: 0, kind: input, shape index: {}]
  %s1 = inlined_call_operand.hbm [shape: f32[128,128], index: 1, kind: input, shape index: {}]
  %s2 = inlined_call_operand.vmem [shape: f32[1,128], index: 2, kind: input, shape index: {}]
  %s3 = inlined_call_operand.hbm [shape: f32[128,128], index: 3, kind: output, shape index: {}]
  %s4 = sld [smem:[#allocation0]]
  $region53: #{tpu_custom_call.1} parent=0
    _
  %s6 = ssub.s32 1, %s4
  %s7 = scalar_select 0, %s6, %s4
  $region1: #{tpu_custom_call.1} parent=0
    #allocation2 [shape = 'u8[65536]{0}', space=vmem, size = 0x10000, scoped, tag = 'input window, operand 0']
    #allocation3 [shape = 's32[2]{0}', space=sflag, size = 0x8, scoped, tag = 'scoped memory for tpu_custom_call.1']
    #allocation4 [shape = 's32[2]{0}', space=sflag, size = 0x8, scoped, tag = 'scoped memory for tpu_custom_call.1']
    #allocation5 [shape = 'u8[65536]{0}', space=vmem, size = 0x10000, scoped, tag = 'input window, operand 1, single buffered']
    #allocation6 [shape = 's32[1]{0}', space=sflag, size = 0x4, scoped, tag = 'scoped memory for tpu_custom_call.1']
    #allocation7 [shape = 'u8[65536]{0}', space=vmem, size = 0x10000, scoped, tag = 'output window, operand 0']
    %8 = vsyncpa [#allocation3], 0
    %s9 = scalar_lea.sflag [#allocation3], 1
    %10 = vsyncpa %s9, 0
    %11 = vsyncpa [#allocation6], 0
    %12 = vsyncpa [#allocation4], 0
    %s13 = scalar_lea.sflag [#allocation4], 1
    %14 = vsyncpa %s13, 0
    loop: start=0, step=1, limit=4
    $region2: #{tpu_custom_call.1} parent=1 // loop_pre_header
      _
    $region3: #{tpu_custom_call.1} parent=1 // loop_header
      %s16 = sphi 0, %s20
      %p17 = scmp.ge.s32.totalorder %s16, 4
      %s26 = sphi 0, %s28
      %s29 = sphi 0, %s26
      %s30 = sphi 0, %s29
      %s46 = sphi 0, %s30
      %s50 = sphi 0, %s50
      %s52 = sphi 0, %s50
      %s53 = sphi 0, %s52
      %s67 = sphi 0, %s53
      %s71 = sphi 0, %s71
      %s73 = sphi 0, %s71
      %s74 = sphi 0, %s73
      %s88 = sphi 0, %s74
      %s94 = sphi 0, %s96
      %s97 = sphi 0, %s94
      %s98 = sphi 0, %s97
      %s114 = sphi 0, %s98
    $region4: #{tpu_custom_call.1} parent=1 // loop_header_branch
      %19 = sbr.rel (%p17) target = $region8
    $region5: #{tpu_custom_call.1} parent=1 // loop_body
      %s21 = ssub.s32 %s16, 1
      %s22 = ssub.s32 %s16, 2
      %s23 = sadd.s32 %s16, 1
      %s24 = ssub.s32 %s16, %s23
      %p25 = scmp.eq.s32.totalorder %s24, 0
      %s27 = sadd.s32 %s26, 1
      %s28 = scalar_select %p25, %s26, %s27
      %p31 = pneg %p25
      %p32 = scmp.eq.s32.totalorder %s16, 1
      %p33 = por %p31, %p32
      %p34 = scmp.ne.s32.totalorder %s26, %s29
      %p35 = scmp.eq.s32.totalorder %s16, 0
      %p36 = por %p34, %p35
      %p37 = scmp.ne.s32.totalorder %s26, %s29
      %p38 = scmp.eq.s32.totalorder %s21, 1
      %p39 = por %p37, %p38
      %p40 = scmp.ne.s32.totalorder %s29, %s30
      %p41 = scmp.eq.s32.totalorder %s21, 0
      %p42 = por %p40, %p41
      %p43 = scmp.ne.s32.totalorder %s29, %s30
      %p44 = scmp.eq.s32.totalorder %s22, 1
      %p45 = por %p43, %p44
      %p47 = scmp.ne.s32.totalorder %s30, %s46
      %p48 = scmp.eq.s32.totalorder %s22, 0
      %p49 = por %p47, %p48
      %s51 = sadd.s32 %s50, 1
      %p54 = scmp.eq.s32.totalorder %s16, 1
      %p55 = scmp.ne.s32.totalorder %s50, %s52
      %p56 = scmp.eq.s32.totalorder %s16, 0
      %p57 = por %p55, %p56
      %p58 = scmp.ne.s32.totalorder %s50, %s52
      %p59 = scmp.eq.s32.totalorder %s21, 1
      %p60 = por %p58, %p59
      %p61 = scmp.ne.s32.totalorder %s52, %s53
      %p62 = scmp.eq.s32.totalorder %s21, 0
      %p63 = por %p61, %p62
      %p64 = scmp.ne.s32.totalorder %s52, %s53
      %p65 = scmp.eq.s32.totalorder %s22, 1
      %p66 = por %p64, %p65
      %p68 = scmp.ne.s32.totalorder %s53, %s67
      %p69 = scmp.eq.s32.totalorder %s22, 0
      %p70 = por %p68, %p69
      %s72 = sadd.s32 %s71, 1
      %p75 = scmp.eq.s32.totalorder %s16, 1
      %p76 = scmp.ne.s32.totalorder %s71, %s73
      %p77 = scmp.eq.s32.totalorder %s16, 0
      %p78 = por %p76, %p77
      %p79 = scmp.ne.s32.totalorder %s71, %s73
      %p80 = scmp.eq.s32.totalorder %s21, 1
      %p81 = por %p79, %p80
      %p82 = scmp.ne.s32.totalorder %s73, %s74
      %p83 = scmp.eq.s32.totalorder %s21, 0
      %p84 = por %p82, %p83
      %p85 = scmp.ne.s32.totalorder %s73, %s74
      %p86 = scmp.eq.s32.totalorder %s22, 1
      %p87 = por %p85, %p86
      %p89 = scmp.ne.s32.totalorder %s74, %s88
      %p90 = scmp.eq.s32.totalorder %s22, 0
      %p91 = por %p89, %p90
      %s92 = ssub.s32 %s16, %s23
      %p93 = scmp.eq.s32.totalorder %s92, 0
      %s95 = sadd.s32 %s94, 1
      %s96 = scalar_select %p93, %s94, %s95
      %p99 = pneg %p93
      %p100 = scmp.eq.s32.totalorder %s16, 1
      %p101 = por %p99, %p100
      %p102 = scmp.ne.s32.totalorder %s94, %s97
      %p103 = scmp.eq.s32.totalorder %s16, 0
      %p104 = por %p102, %p103
      %p105 = scmp.ne.s32.totalorder %s94, %s97
      %p106 = scmp.eq.s32.totalorder %s21, 1
      %p107 = por %p105, %p106
      %p108 = scmp.ne.s32.totalorder %s97, %s98
      %p109 = scmp.eq.s32.totalorder %s21, 0
      %p110 = por %p108, %p109
      %p111 = scmp.ne.s32.totalorder %s97, %s98
      %p112 = scmp.eq.s32.totalorder %s22, 1
      %p113 = por %p111, %p112
      %p115 = scmp.ne.s32.totalorder %s98, %s114
      %p116 = scmp.eq.s32.totalorder %s22, 0
      %p117 = por %p115, %p116
      %p118 = scmp.le.s32.totalorder 1, %s16
      %p119 = scmp.lt.s32.totalorder %s16, 3
      %p120 = pnand %p118, %p119
      %p121 = pneg %p120
      // Predicated region
      $region9: #{tpu_custom_call.1} parent=5 // pred_check
        _
      $region10: #{tpu_custom_call.1} parent=5 // pred_check_branch
        %123 = sbr.rel (%p120) target = $region12
      $region11: #{tpu_custom_call.1} parent=5 // pred_region
        %s124 = ssub.s32 %s16, 1
        // Predicated region
        $region13: #{tpu_custom_call.1} parent=11 // pred_check
          %p125 = pneg %p63
        $region14: #{tpu_custom_call.1} parent=11 // pred_check_branch
          %127 = sbr.rel (%p125) target = $region16
        $region15: #{tpu_custom_call.1} parent=11 // pred_region
          %s129 = ssub.s32 2048, 2048
          %130 = vsyncadd [#allocation6], %s129
          %s131 = sshll.u32 [#allocation5], 4
          %s132 = int_to_ptr.vmem [resolvable:$true] %s131
          %137 = dma.hbm_to_vmem [thread:$0]  %s1, 2048, %s132, [#allocation6], 128, 128, 8
        $region16: #{tpu_custom_call.1} parent=11 // pred_fallthru
          _
        // Predicated region
        $region17: #{tpu_custom_call.1} parent=11 // pred_check
          %p138 = pneg %p84
        $region18: #{tpu_custom_call.1} parent=11 // pred_check_branch
          %140 = sbr.rel (%p138) target = $region20
        $region19: #{tpu_custom_call.1} parent=11 // pred_region
          _
        $region20: #{tpu_custom_call.1} parent=11 // pred_fallthru
          _
      $region12: #{tpu_custom_call.1} parent=5 // pred_fallthru
        _
      %p141 = scmp.lt.s32.totalorder %s16, 2
      // Predicated region
      $region21: #{tpu_custom_call.1} parent=5 // pred_check
        %p142 = pneg %p141
      $region22: #{tpu_custom_call.1} parent=5 // pred_check_branch
        %144 = sbr.rel (%p142) target = $region24
      $region23: #{tpu_custom_call.1} parent=5 // pred_region
        // Predicated region
        $region25: #{tpu_custom_call.1} parent=23 // pred_check
          %p145 = pneg %p36
        $region26: #{tpu_custom_call.1} parent=23 // pred_check_branch
          %147 = sbr.rel (%p145) target = $region28
        $region27: #{tpu_custom_call.1} parent=23 // pred_region
          %s148 = sand.u32 %s26, 1
          %s149 = scalar_lea.sflag [#allocation3], %s148
          %s150 = sand.u32 %s26, 1
          %s151 = smul.addr %s150, 64
          %s152 = scalar_lea.vmem [#allocation2], %s151
          %s153 = smul.u32 8, %s16
          %s155 = ssub.s32 1024, 1024
          %156 = vsyncadd %s149, %s155
          %s157 = smul.addr %s153, 128
          %s158 = scalar_lea.hbm %s0, %s157
          %s159 = sshll.u32 %s152, 4
          %s160 = int_to_ptr.vmem [resolvable:$true] %s159
          %165 = dma.hbm_to_vmem [thread:$0]  %s158, 1024, %s160, %s149, 128, 128, 8
        $region28: #{tpu_custom_call.1} parent=23 // pred_fallthru
          _
      $region24: #{tpu_custom_call.1} parent=5 // pred_fallthru
        _
      %p166 = scmp.le.s32.totalorder 1, %s16
      %p167 = scmp.lt.s32.totalorder %s16, 3
      %p168 = pnand %p166, %p167
      %p169 = pneg %p168
      // Predicated region
      $region29: #{tpu_custom_call.1} parent=5 // pred_check
        _
      $region30: #{tpu_custom_call.1} parent=5 // pred_check_branch
        %171 = sbr.rel (%p168) target = $region32
      $region31: #{tpu_custom_call.1} parent=5 // pred_region
        %s172 = ssub.s32 %s16, 1
        %s173 = sand.u32 %s29, 1
        %s174 = scalar_lea.sflag [#allocation3], %s173
        %s175 = sand.u32 %s29, 1
        %s176 = smul.addr %s175, 64
        %s177 = scalar_lea.vmem [#allocation2], %s176
        // Predicated region
        $region33: #{tpu_custom_call.1} parent=31 // pred_check
          %p178 = pneg %p42
        $region34: #{tpu_custom_call.1} parent=31 // pred_check_branch
          %180 = sbr.rel (%p178) target = $region36
        $region35: #{tpu_custom_call.1} parent=31 // pred_region
          %181 = dma.done %s174, 1024
        $region36: #{tpu_custom_call.1} parent=31 // pred_fallthru
          _
        // Predicated region
        $region37: #{tpu_custom_call.1} parent=31 // pred_check
          %p182 = pneg %p63
        $region38: #{tpu_custom_call.1} parent=31 // pred_check_branch
          %184 = sbr.rel (%p182) target = $region40
        $region39: #{tpu_custom_call.1} parent=31 // pred_region
          %185 = dma.done [#allocation6], 2048
        $region40: #{tpu_custom_call.1} parent=31 // pred_fallthru
          _
        %s186 = sand.u32 %s29, 1
        %s187 = scalar_lea.sflag [#allocation3], %s186
        %s188 = sand.u32 %s29, 1
        %s189 = smul.addr %s188, 64
        %s190 = scalar_lea.vmem [#allocation2], %s189
        %p191 = pneg %p42
        %p192 = pneg %p39
        %p193 = pneg %p63
        %p194 = pneg %p60
        %p195 = pneg %p84
        %p196 = pneg %p81
        %p197 = pneg %p110
        %p198 = pneg %p107
        %s199 = sand.u32 %s97, 1
        %s200 = scalar_lea.sflag [#allocation4], %s199
        %s201 = sand.u32 %s97, 1
        %s202 = smul.addr %s201, 64
        %s203 = scalar_lea.vmem [#allocation7], %s202
        %s204 = smul.u32 8, %s21
        %s205 = smul.u32 8, %s21
        %v206 = vld [vmem:[%s177] sm:$0xff]
        %v207 = vld [vmem:[%s177 + $0x8] sm:$0xff]
        %v208 = vld [vmem:[%s177 + $0x10] sm:$0xff]
        %v209 = vld [vmem:[%s177 + $0x18] sm:$0xff]
        %v210 = vld [vmem:[%s177 + $0x20] sm:$0xff]
        %v211 = vld [vmem:[%s177 + $0x28] sm:$0xff]
        %v212 = vld [vmem:[%s177 + $0x30] sm:$0xff]
        %v213 = vld [vmem:[%s177 + $0x38] sm:$0xff]
        %v214 = vld [vmem:[#allocation5] sm:$0xff]
        %v215 = vld [vmem:[#allocation5 + $0x8] sm:$0xff]
        %v216 = vld [vmem:[#allocation5 + $0x10] sm:$0xff]
        %v217 = vld [vmem:[#allocation5 + $0x18] sm:$0xff]
        %v218 = vld [vmem:[#allocation5 + $0x20] sm:$0xff]
        %v219 = vld [vmem:[#allocation5 + $0x28] sm:$0xff]
        %v220 = vld [vmem:[#allocation5 + $0x30] sm:$0xff]
        %v221 = vld [vmem:[#allocation5 + $0x38] sm:$0xff]
        %v222 = vld [vmem:[#allocation5 + $0x40] sm:$0xff]
        %v223 = vld [vmem:[#allocation5 + $0x48] sm:$0xff]
        %v224 = vld [vmem:[#allocation5 + $0x50] sm:$0xff]
        %v225 = vld [vmem:[#allocation5 + $0x58] sm:$0xff]
        %v226 = vld [vmem:[#allocation5 + $0x60] sm:$0xff]
        %v227 = vld [vmem:[#allocation5 + $0x68] sm:$0xff]
        %v228 = vld [vmem:[#allocation5 + $0x70] sm:$0xff]
        %v229 = vld [vmem:[#allocation5 + $0x78] sm:$0xff]
        %v230 = vld [vmem:[%s2] sm:$0x1]
        %v232 = vlaneseq
        %v233 = vshrl.u32 %v232, 7
        %v234 = vsub.s32 0, %v233
        %v235 = vrot.slane %v230, %v234
        %237 = vmatprep.subr.mxu0 0.0
        %238 = vmatpush1.msra.mxu0 %v214
        %239 = vmatprep.subr.mxu0 0.0
        %240 = vmatpush1.msra.mxu0 %v215
        %241 = vmatprep.subr.mxu0 0.0
        %242 = vmatpush1.msra.mxu0 %v216
        %243 = vmatprep.subr.mxu0 0.0
        %244 = vmatpush1.msra.mxu0 %v217
        %245 = vmatprep.subr.mxu0 0.0
        %246 = vmatpush1.msra.mxu0 %v218
        %247 = vmatprep.subr.mxu0 0.0
        %248 = vmatpush1.msra.mxu0 %v219
        %249 = vmatprep.subr.mxu0 0.0
        %250 = vmatpush1.msra.mxu0 %v220
        %251 = vmatprep.subr.mxu0 0.0
        %252 = vmatpush1.msra.mxu0 %v221
        %253 = vmatprep.subr.mxu0 0.0
        %254 = vmatpush1.msra.mxu0 %v222
        %255 = vmatprep.subr.mxu0 0.0
        %256 = vmatpush1.msra.mxu0 %v223
        %257 = vmatprep.subr.mxu0 0.0
        %258 = vmatpush1.msra.mxu0 %v224
        %259 = vmatprep.subr.mxu0 0.0
        %260 = vmatpush1.msra.mxu0 %v225
        %261 = vmatprep.subr.mxu0 0.0
        %262 = vmatpush1.msra.mxu0 %v226
        %263 = vmatprep.subr.mxu0 0.0
        %264 = vmatpush1.msra.mxu0 %v227
        %265 = vmatprep.subr.mxu0 0.0
        %266 = vmatpush1.msra.mxu0 %v228
        %267 = vmatprep.subr.mxu0 0.0
        %268 = vmatpush1.msra.mxu0 %v229
        %269 = vmatprep.subr.mxu0 0.0
        %270 = vmatpush1.msra.mxu0 0.0
        %271 = vmatprep.subr.mxu0 0.0
        %272 = vmatpush1.msra.mxu0 0.0
        %273 = vmatprep.subr.mxu0 0.0
        %274 = vmatpush1.msra.mxu0 0.0
        %275 = vmatprep.subr.mxu0 0.0
        %276 = vmatpush1.msra.mxu0 0.0
        %277 = vmatprep.subr.mxu0 0.0
        %278 = vmatpush1.msra.mxu0 0.0
        %279 = vmatprep.subr.mxu0 0.0
        %280 = vmatpush1.msra.mxu0 0.0
        %281 = vmatprep.subr.mxu0 0.0
        %282 = vmatpush1.msra.mxu0 0.0
        %283 = vmatprep.subr.mxu0 0.0
        %284 = vmatpush1.msra.mxu0 0.0
        %285 = vmatprep.subr.mxu0 0.0
        %286 = vmatpush1.msra.mxu0 0.0
        %287 = vmatprep.subr.mxu0 0.0
        %288 = vmatpush1.msra.mxu0 0.0
        %289 = vmatprep.subr.mxu0 0.0
        %290 = vmatpush1.msra.mxu0 0.0
        %291 = vmatprep.subr.mxu0 0.0
        %292 = vmatpush1.msra.mxu0 0.0
        %293 = vmatprep.subr.mxu0 0.0
        %294 = vmatpush1.msra.mxu0 0.0
        %295 = vmatprep.subr.mxu0 0.0
        %296 = vmatpush1.msra.mxu0 0.0
        %297 = vmatprep.subr.mxu0 0.0
        %298 = vmatpush1.msra.mxu0 0.0
        %299 = vmatprep.subr.mxu0 0.0
        %300 = vmatpush1.msra.mxu0 0.0
        %301 = vmatprep.mubr.f32.mxu0 0.0
        %302 = vmatmul.mubr.f32.gmra.mrb[0].mxu0 %v206
        %v303 = vpop.f32.mrb[0].mxu0
        %v304 = vadd.f32 %v235, %v303
        %v305 = vpop.f32.mrb[0].mxu0
        %306 = vmatprep.mubr.f32.mxu0 0.0
        %307 = vmatmul.mubr.f32.gmra.mrb[0].mxu0 %v207
        %v308 = vpop.f32.mrb[0].mxu0
        %v309 = vadd.f32 %v235, %v308
        %v310 = vpop.f32.mrb[0].mxu0
        %311 = vmatprep.mubr.f32.mxu0 0.0
        %312 = vmatmul.mubr.f32.gmra.mrb[0].mxu0 %v208
        %v313 = vpop.f32.mrb[0].mxu0
        %v314 = vadd.f32 %v235, %v313
        %v315 = vpop.f32.mrb[0].mxu0
        %316 = vmatprep.mubr.f32.mxu0 0.0
        %317 = vmatmul.mubr.f32.gmra.mrb[0].mxu0 %v209
        %v318 = vpop.f32.mrb[0].mxu0
        %v319 = vadd.f32 %v235, %v318
        %v320 = vpop.f32.mrb[0].mxu0
        %321 = vmatprep.mubr.f32.mxu0 0.0
        %322 = vmatmul.mubr.f32.gmra.mrb[0].mxu0 %v210
        %v323 = vpop.f32.mrb[0].mxu0
        %v324 = vadd.f32 %v235, %v323
        %v325 = vpop.f32.mrb[0].mxu0
        %326 = vmatprep.mubr.f32.mxu0 0.0
        %327 = vmatmul.mubr.f32.gmra.mrb[0].mxu0 %v211
        %v328 = vpop.f32.mrb[0].mxu0
        %v329 = vadd.f32 %v235, %v328
        %v330 = vpop.f32.mrb[0].mxu0
        %331 = vmatprep.mubr.f32.mxu0 0.0
        %332 = vmatmul.mubr.f32.gmra.mrb[0].mxu0 %v212
        %v333 = vpop.f32.mrb[0].mxu0
        %v334 = vadd.f32 %v235, %v333
        %v335 = vpop.f32.mrb[0].mxu0
        %336 = vmatprep.mubr.f32.mxu0 0.0
        %337 = vmatmul.mubr.f32.gmra.mrb[0].mxu0 %v213
        %v338 = vpop.f32.mrb[0].mxu0
        %v339 = vadd.f32 %v235, %v338
        %v340 = vpop.f32.mrb[0].mxu0
        %341 = vdwg.mxu0
        %v342 = vxor.u32 %v304, 2147483648
        %v343 = vxor.u32 %v309, 2147483648
        %v344 = vxor.u32 %v314, 2147483648
        %v345 = vxor.u32 %v319, 2147483648
        %v346 = vxor.u32 %v324, 2147483648
        %v347 = vxor.u32 %v329, 2147483648
        %v348 = vxor.u32 %v334, 2147483648
        %v349 = vxor.u32 %v339, 2147483648
        %v350 = vmul.f32 %v342, 1.442695
        %v351 = vpow.pop %v350
        %v352 = vmul.f32 %v343, 1.442695
        %v353 = vpow.pop %v352
        %v354 = vmul.f32 %v344, 1.442695
        %v355 = vpow.pop %v354
        %v356 = vmul.f32 %v345, 1.442695
        %v357 = vpow.pop %v356
        %v358 = vmul.f32 %v346, 1.442695
        %v359 = vpow.pop %v358
        %v360 = vmul.f32 %v347, 1.442695
        %v361 = vpow.pop %v360
        %v362 = vmul.f32 %v348, 1.442695
        %v363 = vpow.pop %v362
        %v364 = vmul.f32 %v349, 1.442695
        %v365 = vpow.pop %v364
        %v366 = vadd.f32 %v351, 1.0
        %v367 = vadd.f32 %v353, 1.0
        %v368 = vadd.f32 %v355, 1.0
        %v369 = vadd.f32 %v357, 1.0
        %v370 = vadd.f32 %v359, 1.0
        %v371 = vadd.f32 %v361, 1.0
        %v372 = vadd.f32 %v363, 1.0
        %v373 = vadd.f32 %v365, 1.0
        %v374 = vrcp.pop %v366
        %v375 = vmul.f32 1.0, %v374
        %v376 = vrcp.pop %v367
        %v377 = vmul.f32 1.0, %v376
        %v378 = vrcp.pop %v368
        %v379 = vmul.f32 1.0, %v378
        %v380 = vrcp.pop %v369
        %v381 = vmul.f32 1.0, %v380
        %v382 = vrcp.pop %v370
        %v383 = vmul.f32 1.0, %v382
        %v384 = vrcp.pop %v371
        %v385 = vmul.f32 1.0, %v384
        %v386 = vrcp.pop %v372
        %v387 = vmul.f32 1.0, %v386
        %v388 = vrcp.pop %v373
        %v389 = vmul.f32 1.0, %v388
        %390 = vst [vmem:[%s203] sm:$0xff] %v375
        %391 = vst [vmem:[%s203 + $0x8] sm:$0xff] %v377
        %392 = vst [vmem:[%s203 + $0x10] sm:$0xff] %v379
        %393 = vst [vmem:[%s203 + $0x18] sm:$0xff] %v381
        %394 = vst [vmem:[%s203 + $0x20] sm:$0xff] %v383
        %395 = vst [vmem:[%s203 + $0x28] sm:$0xff] %v385
        %396 = vst [vmem:[%s203 + $0x30] sm:$0xff] %v387
        %397 = vst [vmem:[%s203 + $0x38] sm:$0xff] %v389
        %s398 = sand.u32 %s97, 1
        %s399 = scalar_lea.sflag [#allocation4], %s398
        %s400 = sand.u32 %s97, 1
        %s401 = smul.addr %s400, 64
        %s402 = scalar_lea.vmem [#allocation7], %s401
        // Predicated region
        $region41: #{tpu_custom_call.1} parent=31 // pred_check
          %p403 = pneg %p107
        $region42: #{tpu_custom_call.1} parent=31 // pred_check_branch
          %405 = sbr.rel (%p403) target = $region44
        $region43: #{tpu_custom_call.1} parent=31 // pred_region
          %s406 = smul.u32 8, %s21
          %s408 = ssub.s32 1024, 1024
          %409 = vsyncadd %s399, %s408
          %s410 = smul.addr %s406, 128
          %s411 = scalar_lea.hbm %s3, %s410
          %s412 = sshll.u32 %s402, 4
          %s413 = int_to_ptr.vmem [resolvable:$true] %s412
          %418 = dma.vmem_to_hbm [thread:$0]  %s413, 1024, %s411, %s399, 128, 128, 8
        $region44: #{tpu_custom_call.1} parent=31 // pred_fallthru
          _
      $region32: #{tpu_custom_call.1} parent=5 // pred_fallthru
        _
      %p419 = scmp.le.s32.totalorder 2, %s16
      // Predicated region
      $region45: #{tpu_custom_call.1} parent=5 // pred_check
        %p420 = pneg %p419
      $region46: #{tpu_custom_call.1} parent=5 // pred_check_branch
        %422 = sbr.rel (%p420) target = $region48
      $region47: #{tpu_custom_call.1} parent=5 // pred_region
        %s423 = ssub.s32 %s16, 2
        // Predicated region
        $region49: #{tpu_custom_call.1} parent=47 // pred_check
          %p424 = pneg %p113
        $region50: #{tpu_custom_call.1} parent=47 // pred_check_branch
          %426 = sbr.rel (%p424) target = $region52
        $region51: #{tpu_custom_call.1} parent=47 // pred_region
          %s427 = sand.u32 %s98, 1
          %s428 = scalar_lea.sflag [#allocation4], %s427
          %s429 = sand.u32 %s98, 1
          %s430 = smul.addr %s429, 64
          %s431 = scalar_lea.vmem [#allocation7], %s430
          %432 = dma.done %s428, 1024
        $region52: #{tpu_custom_call.1} parent=47 // pred_fallthru
          _
      $region48: #{tpu_custom_call.1} parent=5 // pred_fallthru
        _
    $region6: #{tpu_custom_call.1} parent=1 // loop_footer
      %s20 = sadd.s32 1, %s16
    $region7: #{tpu_custom_call.1} parent=1 // loop_footer_branch
      %15 = sbr.rel target = $region3
    $region8: #{tpu_custom_call.1} parent=1 // loop_exit
      _
    %433 = vsyncpa [#allocation3], 1
    %s434 = scalar_lea.sflag [#allocation3], 1
    %435 = vsyncpa %s434, 1
    %436 = vsyncpa [#allocation6], 1
    %437 = vsyncpa [#allocation4], 1
    %s438 = scalar_lea.sflag [#allocation4], 1
    %439 = vsyncpa %s438, 1

</llo_original>
